<compile_context>
chip_gen: v7x
topology: tpu7x:2x2x1
jax: 0.10.0
libtpu: 0.0.40
codegen_flags: <defaults>
</compile_context>

<pallas_src>
import jax
import jax.numpy as jnp
from jax.experimental import pallas as pl
from jax.experimental.pallas import tpu as pltpu


# ---------------------------------------------------------------------------
# Helpers
# ---------------------------------------------------------------------------

def _round_up(v, m):
    return -(-v // m) * m


def _sublane_pack(itemsize):
    # Sublane packing of the physical (8, 128) f32 tile for narrower dtypes:
    # 8 rows for f32, 16 for bf16, 32 for int8/fp8.
    return max(8, 32 // int(itemsize))


def _vmem_capacity_bytes():
    # Per-generation VMEM (128 MiB on v5e/v6e, 64 MiB per TC on v7x).
    # Fall back to the smallest (v7x) value so tiles always fit everywhere.
    try:
        cap = getattr(pltpu.get_tpu_info(), "vmem_capacity_bytes", None)
        if cap:
            return int(cap)
    except Exception:
        pass
    return 64 * 1024 * 1024


def _sigmoid(z):
    # 1 / (1 + exp(-z)) with both exp and the reciprocal on the EUP slot, so
    # the VALU stays free for the FMA that actually touches all the data.
    # One Newton step restores full f32 accuracy over the approximate vrcp;
    # the clamp keeps exp() finite so the Newton step never evaluates inf*0.
    d = 1.0 + jnp.exp(-jnp.maximum(z, -60.0))
    r = pl.reciprocal(d, approx=True)
    return r * (2.0 - d * r)


def _pick_pixel_tile(hw, padded_rows, itemsize, block_budget, min_steps):
    # x, y and out blocks are each double-buffered by the pipeline:
    # 6 buffers of (padded_rows, tp) elements must fit in `block_budget`.
    budget_tp = block_budget // (6 * padded_rows * itemsize)
    budget_tp = max(128, (budget_tp // 128) * 128)
    if min_steps > 1:
        # Guarantee >= min_steps pixel tiles (megacore split + DMA/compute
        # overlap) whenever the image is big enough for 128-lane tiles.
        split_tp = max(128, ((hw // min_steps) // 128) * 128)
    else:
        split_tp = budget_tp
    tp = min(budget_tp, split_tp)
    return hw if hw <= tp else tp


# ---------------------------------------------------------------------------
# Kernels
# ---------------------------------------------------------------------------

def _abf_kernel_smallc(wcol_ref, b_ref, x_ref, y_ref, o_ref):
    # C <= sublane pack.  Gate via full-width (C, TP) FMAs + XLU sublane
    # reduce (no per-channel (1, TP) VALU ops, no MXU needed).
    #   wcol_ref : (C, 4) columns [wx_g0, wy_g0, wx_g1, wy_g1], input dtype
    #   b_ref    : (1, 2) f32 in SMEM (conv bias)
    #   x/y/o    : (C, TP) — channels on sublanes, pixels on lanes
    x = x_ref[...]
    y = y_ref[...]
    wc = wcol_ref[...]
    t0 = x * wc[:, 0:1] + y * wc[:, 1:2]                     # (C, TP) VPU
    t1 = x * wc[:, 2:3] + y * wc[:, 3:4]                     # (C, TP) VPU
    z0 = jnp.sum(t0, axis=0, keepdims=True).astype(jnp.float32) + b_ref[0, 0]
    z1 = jnp.sum(t1, axis=0, keepdims=True).astype(jnp.float32) + b_ref[0, 1]
    g0 = _sigmoid(z0).astype(x.dtype)                        # (1, TP)
    g1 = _sigmoid(z1).astype(x.dtype)
    o_ref[...] = x * g0 + y * g1                             # native-dtype FMA


def _abf_kernel_mxu(wx_ref, wy_ref, b_ref, x_ref, y_ref, o_ref):
    # Large-C path: gate via (2, C) @ (C, TP) on the MXU (vector-extended
    # slot, free for this memory-bound kernel); the (2, TP) result is
    # lane-dense.  Inputs stay in their native dtype (bf16-native on v6e/v7x).
    # Note: for f32 inputs the dot uses the default MXU precision.
    x = x_ref[...]
    y = y_ref[...]
    z = (jnp.dot(wx_ref[...], x, preferred_element_type=jnp.float32)
         + jnp.dot(wy_ref[...], y, preferred_element_type=jnp.float32))  # (2, TP)
    g0 = _sigmoid(z[0:1, :] + b_ref[0, 0]).astype(x.dtype)
    g1 = _sigmoid(z[1:2, :] + b_ref[0, 1]).astype(x.dtype)
    o_ref[...] = x * g0 + y * g1


def _abf_kernel_c1(w_ref, b_ref, x_ref, y_ref, o_ref):
    # C == 1 (torch.unsqueeze path): the whole op is elementwise per pixel, so
    # pixels are folded onto the sublane axis too (dense blocks, no padding).
    #   w_ref : (1, 4) f32 SMEM = [wx_g0, wy_g0, wx_g1, wy_g1]
    x = x_ref[...].astype(jnp.float32)
    y = y_ref[...].astype(jnp.float32)
    g0 = _sigmoid(w_ref[0, 0] * x + w_ref[0, 1] * y + b_ref[0, 0])
    g1 = _sigmoid(w_ref[0, 2] * x + w_ref[0, 3] * y + b_ref[0, 1])
    o_ref[...] = (x * g0 + y * g1).astype(o_ref.dtype)


# ---------------------------------------------------------------------------
# Wrapper
# ---------------------------------------------------------------------------

def abf_forward(x, y, conv_weight, conv_bias):
    """x, y: (N, C, H, W) or (N, H, W); conv_weight: (2, 2C, 1, 1); conv_bias: (2,)."""
    if x.ndim == 3:                           # mirrors torch.unsqueeze(x/y, 1)
        x = x[:, None]
        y = y[:, None]
    n, c, h, w = x.shape
    assert conv_weight.shape == (2, 2 * c, 1, 1)
    hw = h * w
    dtype = x.dtype
    itemsize = dtype.itemsize
    pack = _sublane_pack(itemsize)

    # 1x1-conv parameters, split over the two concatenated halves.
    w2d = conv_weight.reshape(2, 2 * c)
    wx, wy = w2d[:, :c], w2d[:, c:]           # (2, C) each
    b = conv_bias.reshape(1, 2).astype(jnp.float32)

    # Padded-sublane-aware, per-generation VMEM budgets.
    cap = _vmem_capacity_bytes()
    block_budget = max(8 * 1024 * 1024, min(cap * 5 // 16, 40 * 1024 * 1024))
    vmem_limit = max(32 * 1024 * 1024, min(cap * 3 // 4, 96 * 1024 * 1024))

    # At least ~4 grid steps overall (>= 2 per v7x TensorCore) when possible,
    # so megacore sharding and DMA prefetch/writeback overlap are available.
    min_steps = max(1, -(-4 // n))

    smem = pl.BlockSpec(memory_space=pltpu.MemorySpace.SMEM)
    cparams = pltpu.CompilerParams(
        dimension_semantics=("parallel", "parallel"),
        vmem_limit_bytes=int(vmem_limit))

    if c == 1:
        # Fully elementwise: fold pixels onto sublanes (no sublane padding).
        s = pack
        while s > 1 and hw % s:
            s //= 2
        rows, cols = s, hw // s
        x2 = x.reshape(n, rows, cols)
        y2 = y.reshape(n, rows, cols)
        tp = _pick_pixel_tile(cols, _round_up(rows, pack), itemsize,
                              block_budget, min_steps)
        grid = (n, pl.cdiv(cols, tp))
        block = pl.BlockSpec((None, rows, tp), lambda i, j: (i, 0, j))
        wflat = w2d.astype(jnp.float32).reshape(1, 4)  # [wx_g0, wy_g0, wx_g1, wy_g1]
        out2 = pl.pallas_call(
            _abf_kernel_c1,
            out_shape=jax.ShapeDtypeStruct((n, rows, cols), dtype),
            grid_spec=pltpu.PrefetchScalarGridSpec(
                num_scalar_prefetch=0,
                grid=grid,
                in_specs=[smem, smem, block, block],
                out_specs=block),
            compiler_params=cparams,
        )(wflat, b, x2, y2)
        out = out2.reshape(n, c, h, w)
    else:
        x3 = x.reshape(n, c, hw)              # free reshape; pixels on lanes
        y3 = y.reshape(n, c, hw)
        tp = _pick_pixel_tile(hw, _round_up(c, pack), itemsize,
                              block_budget, min_steps)
        grid = (n, pl.cdiv(hw, tp))           # ragged last tile masked by Pallas
        block = pl.BlockSpec((None, c, tp), lambda i, j: (i, 0, j))

        if c <= pack:
            kernel = _abf_kernel_smallc
            # Weight columns [wx_g0, wy_g0, wx_g1, wy_g1], cast once (bf16-native
            # on v6e/v7x when the activations are bf16).
            wcol = jnp.stack([wx[0], wy[0], wx[1], wy[1]], axis=1).astype(dtype)
            w_args = (wcol,)
            w_specs = [pl.BlockSpec((c, 4), lambda i, j: (0, 0))]
        else:
            kernel = _abf_kernel_mxu
            w_args = (wx.astype(dtype), wy.astype(dtype))
            w_specs = [pl.BlockSpec((2, c), lambda i, j: (0, 0)),
                       pl.BlockSpec((2, c), lambda i, j: (0, 0))]

        out3 = pl.pallas_call(
            kernel,
            out_shape=jax.ShapeDtypeStruct((n, c, hw), dtype),
            grid_spec=pltpu.PrefetchScalarGridSpec(
                num_scalar_prefetch=0,
                grid=grid,
                in_specs=list(w_specs) + [smem, block, block],
                out_specs=block),
            compiler_params=cparams,
        )(*w_args, b, x3, y3)
        out = out3.reshape(n, c, h, w)

    return jnp.squeeze(out)                   # matches torch.squeeze


# ---------------------------------------------------------------------------
# Plain-JAX reference (matches the PyTorch forward)
# ---------------------------------------------------------------------------

def _reference(x, y, conv_weight, conv_bias):
    if x.ndim == 3:
        x = x[:, None]
        y = y[:, None]
    z = jnp.concatenate([x, y], axis=1).astype(jnp.float32)   # (N, 2C, H, W)
    w2d = conv_weight[:, :, 0, 0].astype(jnp.float32)         # (2, 2C)
    zz = jnp.einsum('oc,nchw->nohw', w2d, z,
                    precision=jax.lax.Precision.HIGHEST)
    zz = jax.nn.sigmoid(zz + conv_bias.astype(jnp.float32)[None, :, None, None])
    out = x.astype(jnp.float32) * zz[:, 0:1] + y.astype(jnp.float32) * zz[:, 1:2]
    return jnp.squeeze(out.astype(x.dtype))


# ---------------------------------------------------------------------------
# Self-test
# ---------------------------------------------------------------------------

if __name__ == "__main__":
    key = jax.random.PRNGKey(0)
    k1, k2, k3, k4, k5, k6 = jax.random.split(key, 6)

    # Main path: 4-D inputs, mid_channel C = 4.
    N, C, H, W = 2, 4, 16, 16
    x = jax.random.normal(k1, (N, C, H, W), dtype=jnp.float32)
    y = jax.random.normal(k2, (N, C, H, W), dtype=jnp.float32)

    fan_in = 2 * C
    bound = 1.0 / (fan_in ** 0.5)
    conv_weight = jax.random.uniform(k3, (2, 2 * C, 1, 1), jnp.float32,
                                     minval=-bound, maxval=bound)
    conv_bias = jax.random.uniform(k4, (2,), jnp.float32,
                                   minval=-bound, maxval=bound)

    out = jax.block_until_ready(abf_forward(x, y, conv_weight, conv_bias))
    ref = _reference(x, y, conv_weight, conv_bias)
    assert out.shape == ref.shape
    assert jnp.allclose(out, ref, atol=1e-5, rtol=1e-5), \
        float(jnp.max(jnp.abs(out - ref)))

    # Unsqueeze path: 3-D inputs (torch.unsqueeze(x, 1) branch, C == 1).
    x3d = jax.random.normal(k5, (N, H, W), dtype=jnp.float32)
    y3d = jax.random.normal(k6, (N, H, W), dtype=jnp.float32)
    cw1 = jax.random.uniform(k3, (2, 2, 1, 1), jnp.float32, minval=-0.7, maxval=0.7)
    cb1 = jax.random.uniform(k4, (2,), jnp.float32, minval=-0.7, maxval=0.7)

    out1 = jax.block_until_ready(abf_forward(x3d, y3d, cw1, cb1))
    ref1 = _reference(x3d, y3d, cw1, cb1)
    assert out1.shape == ref1.shape
    assert jnp.allclose(out1, ref1, atol=1e-5, rtol=1e-5), \
        float(jnp.max(jnp.abs(out1 - ref1)))

    print("KERNEL_OK")
</pallas_src>

<mosaic_0001>
module attributes {stable_mosaic.version = 11 : i64} {
  func.func @_abf_kernel_smallc(%arg0: i32, %arg1: i32, %arg2: memref<4x4xf32, #tpu.memory_space<vmem>>, %arg3: memref<1x2xf32, #tpu.memory_space<smem>>, %arg4: memref<1x4x128xf32, #tpu.memory_space<vmem>>, %arg5: memref<1x4x128xf32, #tpu.memory_space<vmem>>, %arg6: memref<1x4x128xf32, #tpu.memory_space<vmem>>) attributes {dimension_semantics = [#tpu.dimension_semantics<parallel>, #tpu.dimension_semantics<parallel>], iteration_bounds = array<i64: 2, 2>, scalar_prefetch = 0 : i64, scratch_operands = 0 : i64, tpu.core_type = #tpu.core_type<tc>, window_params = [{pipeline_mode = #tpu.pipeline_mode<synchronous>, transform_indices = @transform_0, window_bounds = array<i64: 4, 4>}, {transform_indices = @transform_1, window_bounds = array<i64: 1, 2>}, {transform_indices = @transform_2, window_bounds = array<i64: 1, 4, 128>}, {transform_indices = @transform_3, window_bounds = array<i64: 1, 4, 128>}, {transform_indices = @transform_4, window_bounds = array<i64: 1, 4, 128>}]} {
    %c0 = arith.constant 0 : index
    %c0_0 = arith.constant 0 : index
    %c0_1 = arith.constant 0 : index
    %0 = vector.load %arg4[%c0, %c0_0, %c0_1] : memref<1x4x128xf32, #tpu.memory_space<vmem>>, vector<1x4x128xf32>
    %1 = vector.shape_cast %0 : vector<1x4x128xf32> to vector<4x128xf32>
    %c0_2 = arith.constant 0 : index
    %c0_3 = arith.constant 0 : index
    %c0_4 = arith.constant 0 : index
    %2 = vector.load %arg5[%c0_2, %c0_3, %c0_4] : memref<1x4x128xf32, #tpu.memory_space<vmem>>, vector<1x4x128xf32>
    %3 = vector.shape_cast %2 : vector<1x4x128xf32> to vector<4x128xf32>
    %c0_5 = arith.constant 0 : index
    %c0_6 = arith.constant 0 : index
    %4 = vector.load %arg2[%c0_5, %c0_6] : memref<4x4xf32, #tpu.memory_space<vmem>>, vector<4x4xf32>
    %5 = vector.extract_strided_slice %4 {offsets = [0, 0], sizes = [4, 1], strides = [1, 1]} : vector<4x4xf32> to vector<4x1xf32>
    %6 = vector.broadcast %5 : vector<4x1xf32> to vector<4x128xf32>
    %7 = arith.mulf %1, %6 : vector<4x128xf32>
    %8 = vector.extract_strided_slice %4 {offsets = [0, 1], sizes = [4, 1], strides = [1, 1]} : vector<4x4xf32> to vector<4x1xf32>
    %9 = vector.broadcast %8 : vector<4x1xf32> to vector<4x128xf32>
    %10 = arith.mulf %3, %9 : vector<4x128xf32>
    %11 = arith.addf %7, %10 : vector<4x128xf32>
    %12 = vector.extract_strided_slice %4 {offsets = [0, 2], sizes = [4, 1], strides = [1, 1]} : vector<4x4xf32> to vector<4x1xf32>
    %13 = vector.broadcast %12 : vector<4x1xf32> to vector<4x128xf32>
    %14 = arith.mulf %1, %13 : vector<4x128xf32>
    %15 = vector.extract_strided_slice %4 {offsets = [0, 3], sizes = [4, 1], strides = [1, 1]} : vector<4x4xf32> to vector<4x1xf32>
    %16 = vector.broadcast %15 : vector<4x1xf32> to vector<4x128xf32>
    %17 = arith.mulf %3, %16 : vector<4x128xf32>
    %18 = arith.addf %14, %17 : vector<4x128xf32>
    %cst = arith.constant dense<0.000000e+00> : vector<128xf32>
    %19 = vector.multi_reduction <add>, %11, %cst [0] : vector<4x128xf32> to vector<128xf32>
    %20 = vector.shape_cast %19 : vector<128xf32> to vector<1x128xf32>
    %c0_7 = arith.constant 0 : index
    %c0_8 = arith.constant 0 : index
    %21 = memref.load %arg3[%c0_7, %c0_8] : memref<1x2xf32, #tpu.memory_space<smem>>
    %22 = vector.broadcast %21 : f32 to vector<1x128xf32>
    %23 = arith.addf %20, %22 : vector<1x128xf32>
    %cst_9 = arith.constant dense<0.000000e+00> : vector<128xf32>
    %24 = vector.multi_reduction <add>, %18, %cst_9 [0] : vector<4x128xf32> to vector<128xf32>
    %25 = vector.shape_cast %24 : vector<128xf32> to vector<1x128xf32>
    %c0_10 = arith.constant 0 : index
    %c1 = arith.constant 1 : index
    %26 = memref.load %arg3[%c0_10, %c1] : memref<1x2xf32, #tpu.memory_space<smem>>
    %27 = vector.broadcast %26 : f32 to vector<1x128xf32>
    %28 = arith.addf %25, %27 : vector<1x128xf32>
    %cst_11 = arith.constant -6.000000e+01 : f32
    %29 = vector.broadcast %cst_11 : f32 to vector<1x128xf32>
    %30 = arith.maximumf %23, %29 : vector<1x128xf32>
    %cst_12 = arith.constant 0.000000e+00 : f32
    %31 = vector.broadcast %cst_12 : f32 to vector<1x128xf32>
    %32 = arith.subf %31, %30 : vector<1x128xf32>
    %33 = math.exp %32 : vector<1x128xf32>
    %cst_13 = arith.constant 1.000000e+00 : f32
    %34 = vector.broadcast %cst_13 : f32 to vector<1x128xf32>
    %35 = arith.addf %34, %33 : vector<1x128xf32>
    %36 = tpu.reciprocal %35 {approx = true} : vector<1x128xf32> -> vector<1x128xf32>
    %37 = arith.mulf %35, %36 : vector<1x128xf32>
    %cst_14 = arith.constant 2.000000e+00 : f32
    %38 = vector.broadcast %cst_14 : f32 to vector<1x128xf32>
    %39 = arith.subf %38, %37 : vector<1x128xf32>
    %40 = arith.mulf %36, %39 : vector<1x128xf32>
    %cst_15 = arith.constant -6.000000e+01 : f32
    %41 = vector.broadcast %cst_15 : f32 to vector<1x128xf32>
    %42 = arith.maximumf %28, %41 : vector<1x128xf32>
    %cst_16 = arith.constant 0.000000e+00 : f32
    %43 = vector.broadcast %cst_16 : f32 to vector<1x128xf32>
    %44 = arith.subf %43, %42 : vector<1x128xf32>
    %45 = math.exp %44 : vector<1x128xf32>
    %cst_17 = arith.constant 1.000000e+00 : f32
    %46 = vector.broadcast %cst_17 : f32 to vector<1x128xf32>
    %47 = arith.addf %46, %45 : vector<1x128xf32>
    %48 = tpu.reciprocal %47 {approx = true} : vector<1x128xf32> -> vector<1x128xf32>
    %49 = arith.mulf %47, %48 : vector<1x128xf32>
    %cst_18 = arith.constant 2.000000e+00 : f32
    %50 = vector.broadcast %cst_18 : f32 to vector<1x128xf32>
    %51 = arith.subf %50, %49 : vector<1x128xf32>
    %52 = arith.mulf %48, %51 : vector<1x128xf32>
    %53 = vector.broadcast %40 : vector<1x128xf32> to vector<4x128xf32>
    %54 = arith.mulf %1, %53 : vector<4x128xf32>
    %55 = vector.broadcast %52 : vector<1x128xf32> to vector<4x128xf32>
    %56 = arith.mulf %3, %55 : vector<4x128xf32>
    %57 = arith.addf %54, %56 : vector<4x128xf32>
    %c0_19 = arith.constant 0 : index
    %c0_20 = arith.constant 0 : index
    %c0_21 = arith.constant 0 : index
    %58 = vector.load %arg6[%c0_19, %c0_20, %c0_21] : memref<1x4x128xf32, #tpu.memory_space<vmem>>, vector<1x4x128xf32>
    %59 = vector.shape_cast %58 : vector<1x4x128xf32> to vector<4x128xf32>
    %60 = vector.shape_cast %57 : vector<4x128xf32> to vector<1x4x128xf32>
    tpu.vector_store %arg6[%c0_19, %c0_20, %c0_21], %60 {strides = array<i32>} : memref<1x4x128xf32, #tpu.memory_space<vmem>>, vector<1x4x128xf32>,
    return
  }
  func.func @transform_0(%arg0: i32, %arg1: i32) -> (i32, i32) {
    %c0_i32 = arith.constant 0 : i32
    %c0_i32_0 = arith.constant 0 : i32
    %c0_i32_1 = arith.constant 0 : i32
    return %c0_i32, %c0_i32_0 : i32, i32
  }
  func.func @transform_1(%arg0: i32, %arg1: i32) -> (i32, i32) {
    %c0_i32 = arith.constant 0 : i32
    %c0_i32_0 = arith.constant 0 : i32
    %c0_i32_1 = arith.constant 0 : i32
    return %c0_i32, %c0_i32_0 : i32, i32
  }
  func.func @transform_2(%arg0: i32, %arg1: i32) -> (i32, i32, i32) {
    %c0_i32 = arith.constant 0 : i32
    %c0_i32_0 = arith.constant 0 : i32
    return %arg0, %c0_i32, %arg1 : i32, i32, i32
  }
  func.func @transform_3(%arg0: i32, %arg1: i32) -> (i32, i32, i32) {
    %c0_i32 = arith.constant 0 : i32
    %c0_i32_0 = arith.constant 0 : i32
    return %arg0, %c0_i32, %arg1 : i32, i32, i32
  }
  func.func @transform_4(%arg0: i32, %arg1: i32) -> (i32, i32, i32) {
    %c0_i32 = arith.constant 0 : i32
    %c0_i32_0 = arith.constant 0 : i32
    return %arg0, %c0_i32, %arg1 : i32, i32, i32
  }
}

</mosaic_0001>

<llo_original>
// kernel: tpu_custom_call.1
$region0: #{tpu_custom_call.1}
  #allocation0 [shape = 'u32[]', space=smem, size = 0x4, offset = 0x4, fixed_abs, tag = 'smem constant byte address 0x4 - core index']
  #allocation1 [shape = 'u32[144,128]{1,0:T(1,128)}', space=vmem, size = 0x12000, scoped, tag = 'internal scratch']
  %s0 = inlined_call_operand.hbm [shape: f32[4,4], index: 0, kind: input, shape index: {}]
  %s1 = inlined_call_operand.vmem [shape: f32[1,2], index: 1, kind: input, shape index: {}]
  %s2 = inlined_call_operand.hbm [shape: f32[2,4,256], index: 2, kind: input, shape index: {}]
  %s3 = inlined_call_operand.hbm [shape: f32[2,4,256], index: 3, kind: input, shape index: {}]
  %s4 = inlined_call_operand.hbm [shape: f32[2,4,256], index: 4, kind: output, shape index: {}]
  %s5 = sld [smem:[#allocation0]]
  $region65: #{tpu_custom_call.1} parent=0
    _
  %s7 = ssub.s32 1, %s5
  %s8 = scalar_select 0, %s7, %s5
  $region1: #{tpu_custom_call.1} parent=0
    #allocation2 [shape = 'u8[2048]{0}', space=vmem, size = 0x800, scoped, tag = 'input window, operand 0, single buffered']
    #allocation3 [shape = 's32[2]{0}', space=sflag, size = 0x8, scoped, tag = 'scoped memory for tpu_custom_call.1']
    #allocation4 [shape = 's32[2]{0}', space=sflag, size = 0x8, scoped, tag = 'scoped memory for tpu_custom_call.1']
    #allocation5 [shape = 's32[2]{0}', space=sflag, size = 0x8, scoped, tag = 'scoped memory for tpu_custom_call.1']
    #allocation6 [shape = 'u8[512]{0}', space=smem, size = 0x200, scoped, tag = 'input window, operand 1, single buffered']
    #allocation7 [shape = 'u8[4096]{0}', space=vmem, size = 0x1000, scoped, tag = 'input window, operand 2']
    #allocation8 [shape = 's32[2]{0}', space=sflag, size = 0x8, scoped, tag = 'scoped memory for tpu_custom_call.1']
    #allocation9 [shape = 'u8[4096]{0}', space=vmem, size = 0x1000, scoped, tag = 'input window, operand 3']
    #allocation10 [shape = 'u8[4096]{0}', space=vmem, size = 0x1000, scoped, tag = 'output window, operand 0']
    %9 = vsyncpa [#allocation3], 0
    %10 = vsyncpa [#allocation5], 0
    %11 = vsyncpa [#allocation8], 0
    %s12 = scalar_lea.sflag [#allocation8], 1
    %13 = vsyncpa %s12, 0
    %14 = vsyncpa [#allocation4], 0
    %s15 = scalar_lea.sflag [#allocation4], 1
    %16 = vsyncpa %s15, 0
    loop: start=0, step=1, limit=6
    $region2: #{tpu_custom_call.1} parent=1 // loop_pre_header
      _
    $region3: #{tpu_custom_call.1} parent=1 // loop_header
      %s18 = sphi 0, %s22
      %p19 = scmp.ge.s32.totalorder %s18, 6
      %s25 = sphi 0, %s37
      %s26 = sphi 0, %s33
      %s27 = sphi 0, %s25
      %s28 = sphi 0, %s26
      %s29 = sphi 0, %s27
      %s30 = sphi 0, %s28
      %s38 = sphi 0, %s38
      %s40 = sphi 0, %s38
      %s41 = sphi 0, %s40
      %s55 = sphi 0, %s41
      %s59 = sphi 0, %s59
      %s61 = sphi 0, %s59
      %s62 = sphi 0, %s61
      %s76 = sphi 0, %s62
      %s84 = sphi 0, %s86
      %s87 = sphi 0, %s84
      %s88 = sphi 0, %s87
      %s104 = sphi 0, %s88
      %s112 = sphi 0, %s114
      %s115 = sphi 0, %s112
      %s116 = sphi 0, %s115
      %s132 = sphi 0, %s116
      %s140 = sphi 0, %s142
      %s143 = sphi 0, %s140
      %s144 = sphi 0, %s143
      %s160 = sphi 0, %s144
    $region4: #{tpu_custom_call.1} parent=1 // loop_header_branch
      %21 = sbr.rel (%p19) target = $region8
    $region5: #{tpu_custom_call.1} parent=1 // loop_body
      %s23 = ssub.s32 %s18, 1
      %s24 = ssub.s32 %s18, 2
      %s31 = sadd.s32 1, %s26
      %p32 = scmp.ge.s32.totalorder %s31, 2
      %s33 = scalar_select %p32, 0, %s31
      %s34 = sadd.s32 1, %s25
      %s35 = scalar_select %p32, %s34, %s25
      %p36 = scmp.ge.s32.totalorder %s35, 2
      %s37 = scalar_select %p36, 0, %s35
      %s39 = sadd.s32 %s38, 1
      %p42 = scmp.eq.s32.totalorder %s18, 3
      %p43 = scmp.ne.s32.totalorder %s38, %s40
      %p44 = scmp.eq.s32.totalorder %s18, 0
      %p45 = por %p43, %p44
      %p46 = scmp.ne.s32.totalorder %s38, %s40
      %p47 = scmp.eq.s32.totalorder %s23, 3
      %p48 = por %p46, %p47
      %p49 = scmp.ne.s32.totalorder %s40, %s41
      %p50 = scmp.eq.s32.totalorder %s23, 0
      %p51 = por %p49, %p50
      %p52 = scmp.ne.s32.totalorder %s40, %s41
      %p53 = scmp.eq.s32.totalorder %s24, 3
      %p54 = por %p52, %p53
      %p56 = scmp.ne.s32.totalorder %s41, %s55
      %p57 = scmp.eq.s32.totalorder %s24, 0
      %p58 = por %p56, %p57
      %s60 = sadd.s32 %s59, 1
      %p63 = scmp.eq.s32.totalorder %s18, 3
      %p64 = scmp.ne.s32.totalorder %s59, %s61
      %p65 = scmp.eq.s32.totalorder %s18, 0
      %p66 = por %p64, %p65
      %p67 = scmp.ne.s32.totalorder %s59, %s61
      %p68 = scmp.eq.s32.totalorder %s23, 3
      %p69 = por %p67, %p68
      %p70 = scmp.ne.s32.totalorder %s61, %s62
      %p71 = scmp.eq.s32.totalorder %s23, 0
      %p72 = por %p70, %p71
      %p73 = scmp.ne.s32.totalorder %s61, %s62
      %p74 = scmp.eq.s32.totalorder %s24, 3
      %p75 = por %p73, %p74
      %p77 = scmp.ne.s32.totalorder %s62, %s76
      %p78 = scmp.eq.s32.totalorder %s24, 0
      %p79 = por %p77, %p78
      %s80 = ssub.s32 %s25, %s37
      %s81 = ssub.s32 %s26, %s33
      %s82 = sor.u32 %s80, %s81
      %p83 = scmp.eq.s32.totalorder %s82, 0
      %s85 = sadd.s32 %s84, 1
      %s86 = scalar_select %p83, %s84, %s85
      %p89 = pneg %p83
      %p90 = scmp.eq.s32.totalorder %s18, 3
      %p91 = por %p89, %p90
      %p92 = scmp.ne.s32.totalorder %s84, %s87
      %p93 = scmp.eq.s32.totalorder %s18, 0
      %p94 = por %p92, %p93
      %p95 = scmp.ne.s32.totalorder %s84, %s87
      %p96 = scmp.eq.s32.totalorder %s23, 3
      %p97 = por %p95, %p96
      %p98 = scmp.ne.s32.totalorder %s87, %s88
      %p99 = scmp.eq.s32.totalorder %s23, 0
      %p100 = por %p98, %p99
      %p101 = scmp.ne.s32.totalorder %s87, %s88
      %p102 = scmp.eq.s32.totalorder %s24, 3
      %p103 = por %p101, %p102
      %p105 = scmp.ne.s32.totalorder %s88, %s104
      %p106 = scmp.eq.s32.totalorder %s24, 0
      %p107 = por %p105, %p106
      %s108 = ssub.s32 %s25, %s37
      %s109 = ssub.s32 %s26, %s33
      %s110 = sor.u32 %s108, %s109
      %p111 = scmp.eq.s32.totalorder %s110, 0
      %s113 = sadd.s32 %s112, 1
      %s114 = scalar_select %p111, %s112, %s113
      %p117 = pneg %p111
      %p118 = scmp.eq.s32.totalorder %s18, 3
      %p119 = por %p117, %p118
      %p120 = scmp.ne.s32.totalorder %s112, %s115
      %p121 = scmp.eq.s32.totalorder %s18, 0
      %p122 = por %p120, %p121
      %p123 = scmp.ne.s32.totalorder %s112, %s115
      %p124 = scmp.eq.s32.totalorder %s23, 3
      %p125 = por %p123, %p124
      %p126 = scmp.ne.s32.totalorder %s115, %s116
      %p127 = scmp.eq.s32.totalorder %s23, 0
      %p128 = por %p126, %p127
      %p129 = scmp.ne.s32.totalorder %s115, %s116
      %p130 = scmp.eq.s32.totalorder %s24, 3
      %p131 = por %p129, %p130
      %p133 = scmp.ne.s32.totalorder %s116, %s132
      %p134 = scmp.eq.s32.totalorder %s24, 0
      %p135 = por %p133, %p134
      %s136 = ssub.s32 %s25, %s37
      %s137 = ssub.s32 %s26, %s33
      %s138 = sor.u32 %s136, %s137
      %p139 = scmp.eq.s32.totalorder %s138, 0
      %s141 = sadd.s32 %s140, 1
      %s142 = scalar_select %p139, %s140, %s141
      %p145 = pneg %p139
      %p146 = scmp.eq.s32.totalorder %s18, 3
      %p147 = por %p145, %p146
      %p148 = scmp.ne.s32.totalorder %s140, %s143
      %p149 = scmp.eq.s32.totalorder %s18, 0
      %p150 = por %p148, %p149
      %p151 = scmp.ne.s32.totalorder %s140, %s143
      %p152 = scmp.eq.s32.totalorder %s23, 3
      %p153 = por %p151, %p152
      %p154 = scmp.ne.s32.totalorder %s143, %s144
      %p155 = scmp.eq.s32.totalorder %s23, 0
      %p156 = por %p154, %p155
      %p157 = scmp.ne.s32.totalorder %s143, %s144
      %p158 = scmp.eq.s32.totalorder %s24, 3
      %p159 = por %p157, %p158
      %p161 = scmp.ne.s32.totalorder %s144, %s160
      %p162 = scmp.eq.s32.totalorder %s24, 0
      %p163 = por %p161, %p162
      %p164 = scmp.le.s32.totalorder 1, %s18
      %p165 = scmp.lt.s32.totalorder %s18, 5
      %p166 = pnand %p164, %p165
      %p167 = pneg %p166
      // Predicated region
      $region9: #{tpu_custom_call.1} parent=5 // pred_check
        _
      $region10: #{tpu_custom_call.1} parent=5 // pred_check_branch
        %169 = sbr.rel (%p166) target = $region12
      $region11: #{tpu_custom_call.1} parent=5 // pred_region
        %s170 = ssub.s32 %s18, 1
        // Predicated region
        $region13: #{tpu_custom_call.1} parent=11 // pred_check
          %p171 = pneg %p51
        $region14: #{tpu_custom_call.1} parent=11 // pred_check_branch
          %173 = sbr.rel (%p171) target = $region16
        $region15: #{tpu_custom_call.1} parent=11 // pred_region
          %s175 = ssub.s32 64, 64
          %176 = vsyncadd [#allocation3], %s175
          %s178 = sshll.u32 [#allocation2], 4
          %s179 = int_to_ptr.vmem [resolvable:$true] %s178
          %181 = dma.hbm_to_vmem [thread:$0]  %s0, 64, %s179, [#allocation3]
        $region16: #{tpu_custom_call.1} parent=11 // pred_fallthru
          _
        // Predicated region
        $region17: #{tpu_custom_call.1} parent=11 // pred_check
          %p182 = pneg %p72
        $region18: #{tpu_custom_call.1} parent=11 // pred_check_branch
          %184 = sbr.rel (%p182) target = $region20
        $region19: #{tpu_custom_call.1} parent=11 // pred_region
          %s186 = ssub.s32 16, 16
          %187 = vsyncadd [#allocation5], %s186
          %s189 = sshll.u32 %s1, 4
          %s190 = int_to_ptr.vmem [resolvable:$true] %s189
          %192 = dma.vmem_to_smem %s190, 16, [#allocation6], [#allocation5]
        $region20: #{tpu_custom_call.1} parent=11 // pred_fallthru
          _
      $region12: #{tpu_custom_call.1} parent=5 // pred_fallthru
        _
      %p193 = scmp.lt.s32.totalorder %s18, 4
      // Predicated region
      $region21: #{tpu_custom_call.1} parent=5 // pred_check
        %p194 = pneg %p193
      $region22: #{tpu_custom_call.1} parent=5 // pred_check_branch
        %196 = sbr.rel (%p194) target = $region24
      $region23: #{tpu_custom_call.1} parent=5 // pred_region
        // Predicated region
        $region25: #{tpu_custom_call.1} parent=23 // pred_check
          %p197 = pneg %p94
        $region26: #{tpu_custom_call.1} parent=23 // pred_check_branch
          %199 = sbr.rel (%p197) target = $region28
        $region27: #{tpu_custom_call.1} parent=23 // pred_region
          %s200 = sand.u32 %s18, 1
          %s201 = scalar_lea.sflag [#allocation8], %s200
          %s202 = sand.u32 %s84, 1
          %s203 = smul.addr %s202, 4
          %s204 = scalar_lea.vmem [#allocation7], %s203
          %s206 = ssub.s32 64, 64
          %207 = vsyncadd %s201, %s206
          %s208 = smul.addr %s25, 2
          %s209 = sadd.s32 %s26, %s208
          %s210 = smul.addr %s209, 64
          %s211 = scalar_lea.hbm %s2, %s210
          %s213 = sshll.u32 %s204, 4
          %s214 = int_to_ptr.vmem [resolvable:$true] %s213
          %216 = dma.hbm_to_vmem [thread:$0]  %s211, 64, %s214, %s201
        $region28: #{tpu_custom_call.1} parent=23 // pred_fallthru
          _
        // Predicated region
        $region29: #{tpu_custom_call.1} parent=23 // pred_check
          %p217 = pneg %p122
        $region30: #{tpu_custom_call.1} parent=23 // pred_check_branch
          %219 = sbr.rel (%p217) target = $region32
        $region31: #{tpu_custom_call.1} parent=23 // pred_region
          %s220 = sand.u32 %s18, 1
          %s221 = scalar_lea.sflag [#allocation8], %s220
          %s222 = sand.u32 %s112, 1
          %s223 = smul.addr %s222, 4
          %s224 = scalar_lea.vmem [#allocation9], %s223
          %s226 = ssub.s32 64, 64
          %227 = vsyncadd %s221, %s226
          %s228 = smul.addr %s25, 2
          %s229 = sadd.s32 %s26, %s228
          %s230 = smul.addr %s229, 64
          %s231 = scalar_lea.hbm %s3, %s230
          %s233 = sshll.u32 %s224, 4
          %s234 = int_to_ptr.vmem [resolvable:$true] %s233
          %236 = dma.hbm_to_vmem [thread:$0]  %s231, 64, %s234, %s221
        $region32: #{tpu_custom_call.1} parent=23 // pred_fallthru
          _
      $region24: #{tpu_custom_call.1} parent=5 // pred_fallthru
        _
      %p237 = scmp.le.s32.totalorder 1, %s18
      %p238 = scmp.lt.s32.totalorder %s18, 5
      %p239 = pnand %p237, %p238
      %p240 = pneg %p239
      // Predicated region
      $region33: #{tpu_custom_call.1} parent=5 // pred_check
        _
      $region34: #{tpu_custom_call.1} parent=5 // pred_check_branch
        %242 = sbr.rel (%p239) target = $region36
      $region35: #{tpu_custom_call.1} parent=5 // pred_region
        %s243 = ssub.s32 %s18, 1
        // Predicated region
        $region37: #{tpu_custom_call.1} parent=35 // pred_check
          %p244 = pneg %p51
        $region38: #{tpu_custom_call.1} parent=35 // pred_check_branch
          %246 = sbr.rel (%p244) target = $region40
        $region39: #{tpu_custom_call.1} parent=35 // pred_region
          %247 = dma.done [#allocation3], 64
        $region40: #{tpu_custom_call.1} parent=35 // pred_fallthru
          _
        // Predicated region
        $region41: #{tpu_custom_call.1} parent=35 // pred_check
          %p248 = pneg %p72
        $region42: #{tpu_custom_call.1} parent=35 // pred_check_branch
          %250 = sbr.rel (%p248) target = $region44
        $region43: #{tpu_custom_call.1} parent=35 // pred_region
          %251 = dma.done [#allocation5], 16
        $region44: #{tpu_custom_call.1} parent=35 // pred_fallthru
          _
        %s252 = sand.u32 %s23, 1
        %s253 = scalar_lea.sflag [#allocation8], %s252
        %s254 = sand.u32 %s87, 1
        %s255 = smul.addr %s254, 4
        %s256 = scalar_lea.vmem [#allocation7], %s255
        // Predicated region
        $region45: #{tpu_custom_call.1} parent=35 // pred_check
          %p257 = pneg %p100
        $region46: #{tpu_custom_call.1} parent=35 // pred_check_branch
          %259 = sbr.rel (%p257) target = $region48
        $region47: #{tpu_custom_call.1} parent=35 // pred_region
          %260 = dma.done %s253, 64
        $region48: #{tpu_custom_call.1} parent=35 // pred_fallthru
          _
        %s261 = sand.u32 %s23, 1
        %s262 = scalar_lea.sflag [#allocation8], %s261
        %s263 = sand.u32 %s115, 1
        %s264 = smul.addr %s263, 4
        %s265 = scalar_lea.vmem [#allocation9], %s264
        // Predicated region
        $region49: #{tpu_custom_call.1} parent=35 // pred_check
          %p266 = pneg %p128
        $region50: #{tpu_custom_call.1} parent=35 // pred_check_branch
          %268 = sbr.rel (%p266) target = $region52
        $region51: #{tpu_custom_call.1} parent=35 // pred_region
          %269 = dma.done %s262, 64
        $region52: #{tpu_custom_call.1} parent=35 // pred_fallthru
          _
        %270 = sfence
        %p271 = pneg %p51
        %p272 = pneg %p48
        %p273 = pneg %p72
        %p274 = pneg %p69
        %s275 = sand.u32 %s23, 1
        %s276 = scalar_lea.sflag [#allocation8], %s275
        %s277 = sand.u32 %s87, 1
        %s278 = smul.addr %s277, 4
        %s279 = scalar_lea.vmem [#allocation7], %s278
        %p280 = pneg %p100
        %p281 = pneg %p97
        %s282 = sand.u32 %s23, 1
        %s283 = scalar_lea.sflag [#allocation8], %s282
        %s284 = sand.u32 %s115, 1
        %s285 = smul.addr %s284, 4
        %s286 = scalar_lea.vmem [#allocation9], %s285
        %p287 = pneg %p128
        %p288 = pneg %p125
        %p289 = pneg %p156
        %p290 = pneg %p153
        %s291 = sand.u32 %s143, 1
        %s292 = scalar_lea.sflag [#allocation4], %s291
        %s293 = sand.u32 %s143, 1
        %s294 = smul.addr %s293, 4
        %s295 = scalar_lea.vmem [#allocation10], %s294
        %v296 = vld [vmem:[%s256] sm:$0xf]
        %v297 = vld [vmem:[%s265] sm:$0xf]
        %v298 = vld [vmem:[#allocation2] sm:$0xf]
        %300 = vset.pattern.permute.xlu0 0
        %301 = vperm.xlu0 %300, %v298
        %v302 = vpop.permute.xlu0 %301
        %v304 = vmul.f32 %v296, %v302
        %305 = vset.pattern.permute.xlu0 1
        %306 = vperm.xlu0 %305, %v298
        %v307 = vpop.permute.xlu0 %306
        %v309 = vmul.f32 %v297, %v307
        %v310 = vadd.f32 %v304, %v309
        %311 = vset.pattern.permute.xlu0 2
        %312 = vperm.xlu0 %311, %v298
        %v313 = vpop.permute.xlu0 %312
        %v315 = vmul.f32 %v296, %v313
        %316 = vset.pattern.permute.xlu0 3
        %317 = vperm.xlu0 %316, %v298
        %v318 = vpop.permute.xlu0 %317
        %v320 = vmul.f32 %v297, %v318
        %v321 = vadd.f32 %v315, %v320
        %vm322 = vcmask 1043456
        %v323 = vsel %vm322, %v310, 0.0
        %v324 = vrot.slane %v323, 4
        %v325 = vadd.f32 %v323, %v324
        %v326 = vrot.slane %v325, 2
        %v327 = vadd.f32 %v325, %v326
        %v328 = vrot.slane %v327, 1
        %v329 = vadd.f32 %v327, %v328
        %s330 = sld [smem:[#allocation6]]
        %v331 = vstv %s330
        %v332 = vadd.f32 %v329, %v331
        %v333 = vsel %vm322, %v321, 0.0
        %v334 = vrot.slane %v333, 4
        %v335 = vadd.f32 %v333, %v334
        %v336 = vrot.slane %v335, 2
        %v337 = vadd.f32 %v335, %v336
        %v338 = vrot.slane %v337, 1
        %v339 = vadd.f32 %v337, %v338
        %s340 = sld [smem:[#allocation6 + $0x1]]
        %v341 = vstv %s340
        %v342 = vadd.f32 %v339, %v341
        %v343 = vmax.f32 %v332, -60.0
        %v344 = vsub.f32 0.0, %v343
        %v345 = vmul.f32 %v344, 1.442695
        %v346 = vpow.pop %v345
        %v347 = vadd.f32 %v346, 1.0
        %v348 = vrcp.pop %v347
        %v349 = vmul.f32 %v347, %v348
        %v350 = vsub.f32 2.0, %v349
        %v351 = vmul.f32 %v348, %v350
        %v352 = vmax.f32 %v342, -60.0
        %v353 = vsub.f32 0.0, %v352
        %v354 = vmul.f32 %v353, 1.442695
        %v355 = vpow.pop %v354
        %v356 = vadd.f32 %v355, 1.0
        %v357 = vrcp.pop %v356
        %v358 = vmul.f32 %v356, %v357
        %v359 = vsub.f32 2.0, %v358
        %v360 = vmul.f32 %v357, %v359
        %v361 = vmul.f32 %v296, %v351
        %v362 = vmul.f32 %v297, %v360
        %v363 = vadd.f32 %v361, %v362
        %364 = vst [vmem:[%s295] sm:$0xf] %v363
        %s365 = sand.u32 %s143, 1
        %s366 = scalar_lea.sflag [#allocation4], %s365
        %s367 = sand.u32 %s143, 1
        %s368 = smul.addr %s367, 4
        %s369 = scalar_lea.vmem [#allocation10], %s368
        // Predicated region
        $region53: #{tpu_custom_call.1} parent=35 // pred_check
          %p370 = pneg %p153
        $region54: #{tpu_custom_call.1} parent=35 // pred_check_branch
          %372 = sbr.rel (%p370) target = $region56
        $region55: #{tpu_custom_call.1} parent=35 // pred_region
          %s374 = ssub.s32 64, 64
          %375 = vsyncadd %s366, %s374
          %s376 = smul.addr %s27, 2
          %s377 = sadd.s32 %s28, %s376
          %s378 = smul.addr %s377, 64
          %s379 = scalar_lea.hbm %s4, %s378
          %s381 = sshll.u32 %s369, 4
          %s382 = int_to_ptr.vmem [resolvable:$true] %s381
          %384 = dma.vmem_to_hbm [thread:$0]  %s382, 64, %s379, %s366
        $region56: #{tpu_custom_call.1} parent=35 // pred_fallthru
          _
      $region36: #{tpu_custom_call.1} parent=5 // pred_fallthru
        _
      %p385 = scmp.le.s32.totalorder 2, %s18
      // Predicated region
      $region57: #{tpu_custom_call.1} parent=5 // pred_check
        %p386 = pneg %p385
      $region58: #{tpu_custom_call.1} parent=5 // pred_check_branch
        %388 = sbr.rel (%p386) target = $region60
      $region59: #{tpu_custom_call.1} parent=5 // pred_region
        %s389 = ssub.s32 %s18, 2
        // Predicated region
        $region61: #{tpu_custom_call.1} parent=59 // pred_check
          %p390 = pneg %p159
        $region62: #{tpu_custom_call.1} parent=59 // pred_check_branch
          %392 = sbr.rel (%p390) target = $region64
        $region63: #{tpu_custom_call.1} parent=59 // pred_region
          %s393 = sand.u32 %s144, 1
          %s394 = scalar_lea.sflag [#allocation4], %s393
          %s395 = sand.u32 %s144, 1
          %s396 = smul.addr %s395, 4
          %s397 = scalar_lea.vmem [#allocation10], %s396
          %398 = dma.done %s394, 64
        $region64: #{tpu_custom_call.1} parent=59 // pred_fallthru
          _
      $region60: #{tpu_custom_call.1} parent=5 // pred_fallthru
        _
    $region6: #{tpu_custom_call.1} parent=1 // loop_footer
      %s22 = sadd.s32 1, %s18
    $region7: #{tpu_custom_call.1} parent=1 // loop_footer_branch
      %17 = sbr.rel target = $region3
    $region8: #{tpu_custom_call.1} parent=1 // loop_exit
      _
    %399 = vsyncpa [#allocation3], 1
    %s400 = scalar_lea.sflag [#allocation3], 1
    %401 = vsyncpa %s400, 1
    %402 = vsyncpa [#allocation8], 1
    %s403 = scalar_lea.sflag [#allocation8], 1
    %404 = vsyncpa %s403, 1
    %405 = vsyncpa [#allocation4], 1
    %s406 = scalar_lea.sflag [#allocation4], 1
    %407 = vsyncpa %s406, 1
    %408 = vsyncpa [#allocation5], 1
    %s409 = scalar_lea.sflag [#allocation5], 1
    %410 = vsyncpa %s409, 1

</llo_original>
